<compile_context>
chip_gen: v7x
topology: tpu7x:2x2x1
jax: 0.10.0
libtpu: 0.0.40
codegen_flags: <defaults>
</compile_context>

<pallas_src>
import functools
import math

import jax
import jax.numpy as jnp
from jax.experimental import pallas as pl
from jax.experimental.pallas import tpu as pltpu


def _cdiv(a: int, b: int) -> int:
    return -(-a // b)


def _round_up(a: int, b: int) -> int:
    return _cdiv(a, b) * b


def _single_linear_kernel(x_ref, p_ref, o_ref, *, group):
    """One (row-tile, d-tile) grid step.

    x_ref: (tr, group)       grouped scalar inputs
    p_ref: (group + 1, dt)   rows [0:group] = (block-diagonal) weight,
                             row  [group]   = bias (lane-tiled)
    o_ref: (tr, dt)          lane-dense output tile
    """
    x = x_ref[...].astype(jnp.float32)
    w = p_ref[0:group, :]
    b = p_ref[group:group + 1, :]
    if group == 1:
        # Plain VPU broadcast-FMA: (tr, 1) * (1, dt) + (1, dt).
        out = x * w + b
    else:
        # Lane expansion on the MXU: x (tr, G) @ block-diag W (G, G*d) + b.
        # Exactly one nonzero per output column -> exact in f32 at HIGHEST.
        out = jnp.dot(x, w,
                      preferred_element_type=jnp.float32,
                      precision=jax.lax.Precision.HIGHEST) + b
    o_ref[...] = out.astype(o_ref.dtype)


def single_linear(x: jax.Array, weight: jax.Array, bias: jax.Array) -> jax.Array:
    """Equivalent of torch nn.Linear(1, d_model) applied to x of shape (..., 1).

    weight: (d_model, 1)  (PyTorch convention)
    bias:   (d_model,)
    """
    assert x.shape[-1] == 1, "SingleLinear expects a trailing dim of 1"
    d_model = int(weight.shape[0])
    lead_shape = x.shape[:-1]
    n_rows = int(math.prod(lead_shape)) if lead_shape else 1
    out_dtype = x.dtype

    if n_rows == 0 or d_model == 0:
        return jnp.zeros((*lead_shape, d_model), out_dtype)

    x_isz = jnp.dtype(x.dtype).itemsize
    o_isz = jnp.dtype(out_dtype).itemsize
    sublane = {4: 8, 2: 16, 1: 32}.get(o_isz, 8)

    # ---- lane-dense grouping: pack G rows per 128-lane output row ---------
    if d_model < 128 and 128 % d_model == 0:
        group = 128 // d_model
    else:
        group = 1
    # TODO(synk): d_model that neither divides 128 nor is a multiple of 128
    # (e.g. 48, 96) falls back to group=1 with masked tail-lane stores.
    lanes_total = group * d_model

    rows = _cdiv(n_rows, group)
    pad_rows = rows * group - n_rows            # <= group - 1 scalars on x only

    # ---- tile sizing from an explicit VMEM budget --------------------------
    OUT_TILE_TARGET = 6 * 1024 * 1024           # ~6 MiB output per grid step
    PIPE_BUDGET = 24 * 1024 * 1024              # double-buffered in + out blocks
    VMEM_LIMIT = 32 * 1024 * 1024               # safe on v5e / v6e / v7x

    # Feature-axis tile: full width normally; split (parallel grid axis) only
    # when d_model is so large a sublane-row block would blow the budget.
    if group == 1 and d_model > 128:
        max_dt = max(128, ((OUT_TILE_TARGET // (sublane * o_isz)) // 128) * 128)
        d_tile = d_model if d_model <= max_dt else max_dt
    else:
        d_tile = lanes_total
    num_d_tiles = _cdiv(lanes_total, d_tile)

    # Row tile: budget counts the output block AND the lane-padded x block
    # ((tr, group) occupies tr*128 elements in VMEM), both double-buffered.
    row_out_bytes = d_tile * o_isz
    row_in_bytes = 128 * x_isz
    tr_target = max(
        sublane,
        min(OUT_TILE_TARGET // row_out_bytes,
            PIPE_BUDGET // (2 * (row_out_bytes + row_in_bytes))),
    )
    # Keep >= 4 row steps when there is enough work: 2 steps per TensorCore on
    # v7x megacore and a live DMA pipeline everywhere.
    MIN_ROW_STEPS = 4
    if rows >= MIN_ROW_STEPS * sublane:
        tr_target = min(tr_target, _round_up(_cdiv(rows, MIN_ROW_STEPS), sublane))
    tr = _round_up(min(tr_target, rows), sublane)
    num_row_tiles = _cdiv(rows, tr)

    # ---- operands -----------------------------------------------------------
    x2 = x.reshape(n_rows, 1)
    if pad_rows:
        x2 = jnp.pad(x2, ((0, pad_rows), (0, 0)))
    x_grouped = x2.reshape(rows, group)

    # Params stay in (at least) their native precision: fused (group+1, lanes)
    # float32 array, VMEM-resident via a constant index_map.
    w_flat = weight.reshape(d_model).astype(jnp.float32)
    b_flat = bias.reshape(d_model).astype(jnp.float32)
    if group == 1:
        params = jnp.stack([w_flat, b_flat], axis=0)                   # (2, d)
    else:
        eye = jnp.eye(group, dtype=jnp.float32)
        wg = (eye[:, :, None] * w_flat[None, None, :]).reshape(group, lanes_total)
        bg = jnp.tile(b_flat[None, :], (1, group))
        params = jnp.concatenate([wg, bg], axis=0)                     # (G+1, 128)

    kernel = functools.partial(_single_linear_kernel, group=group)

    out = pl.pallas_call(
        kernel,
        out_shape=jax.ShapeDtypeStruct((rows, lanes_total), out_dtype),
        grid=(num_row_tiles, num_d_tiles),
        in_specs=[
            pl.BlockSpec((tr, group), lambda i, j: (i, 0)),            # x rows
            pl.BlockSpec((group + 1, d_tile), lambda i, j: (0, j)),    # params
        ],
        out_specs=pl.BlockSpec((tr, d_tile), lambda i, j: (i, j)),
        compiler_params=pltpu.CompilerParams(
            dimension_semantics=("parallel", "parallel"),
            vmem_limit_bytes=VMEM_LIMIT,
        ),
    )(x_grouped, params)

    y = out.reshape(rows * group, d_model)
    if pad_rows:
        y = y[:n_rows]
    return y.reshape(*lead_shape, d_model)


if __name__ == "__main__":
    d_model = 32
    batch, seq = 2, 8

    key = jax.random.PRNGKey(0)
    kx, kw, kb = jax.random.split(key, 3)

    # Parameter init mirroring nn.Linear(1, d_model):
    # U(-1/sqrt(in_features), 1/sqrt(in_features)), in_features = 1.
    bound = 1.0 / math.sqrt(1.0)
    weight = jax.random.uniform(kw, (d_model, 1), jnp.float32, -bound, bound)
    bias = jax.random.uniform(kb, (d_model,), jnp.float32, -bound, bound)

    x = jax.random.normal(kx, (batch, seq, 1), jnp.float32)

    y = single_linear(x, weight, bias)
    y = jax.block_until_ready(y)

    # Exact elementwise reference (same math as torch Linear(1, d_model)).
    y_ref = x * weight.reshape(-1) + bias
    assert y.shape == (batch, seq, d_model)
    assert jnp.allclose(y, y_ref, atol=1e-5, rtol=1e-5)

    print("KERNEL_OK")
</pallas_src>

<mosaic_0001>
module attributes {stable_mosaic.version = 11 : i64} {
  func.func @_single_linear_kernel(%arg0: i32, %arg1: i32, %arg2: memref<8x4xf32, #tpu.memory_space<vmem>>, %arg3: memref<5x128xf32, #tpu.memory_space<vmem>>, %arg4: memref<8x128xf32, #tpu.memory_space<vmem>>) attributes {dimension_semantics = [#tpu.dimension_semantics<parallel>, #tpu.dimension_semantics<parallel>], iteration_bounds = array<i64: 1, 1>, scalar_prefetch = 0 : i64, scratch_operands = 0 : i64, tpu.core_type = #tpu.core_type<tc>, window_params = [{transform_indices = @transform_0, window_bounds = array<i64: 8, 4>}, {transform_indices = @transform_1, window_bounds = array<i64: 5, 128>}, {transform_indices = @transform_2, window_bounds = array<i64: 8, 128>}]} {
    %c0 = arith.constant 0 : index
    %c0_0 = arith.constant 0 : index
    %0 = vector.load %arg2[%c0, %c0_0] : memref<8x4xf32, #tpu.memory_space<vmem>>, vector<8x4xf32>
    %c0_1 = arith.constant 0 : index
    %c0_2 = arith.constant 0 : index
    %1 = vector.load %arg3[%c0_1, %c0_2] : memref<5x128xf32, #tpu.memory_space<vmem>>, vector<4x128xf32>
    %c4 = arith.constant 4 : index
    %c0_3 = arith.constant 0 : index
    %2 = vector.load %arg3[%c4, %c0_3] : memref<5x128xf32, #tpu.memory_space<vmem>>, vector<1x128xf32>
    %cst = arith.constant dense<0.000000e+00> : vector<8x128xf32>
    %3 = tpu.matmul %0, %1, %cst {dimension_numbers = #tpu.dot_dimension_numbers<[1], [0], [0], [1], [0, 0, 1, 1], [], []>, precision = #tpu.contract_precision<fp32>} : vector<8x4xf32>, vector<4x128xf32>, vector<8x128xf32> -> vector<8x128xf32>
    %4 = vector.broadcast %2 : vector<1x128xf32> to vector<8x128xf32>
    %5 = arith.addf %3, %4 : vector<8x128xf32>
    %c0_4 = arith.constant 0 : index
    %c0_5 = arith.constant 0 : index
    %6 = vector.load %arg4[%c0_4, %c0_5] : memref<8x128xf32, #tpu.memory_space<vmem>>, vector<8x128xf32>
    tpu.vector_store %arg4[%c0_4, %c0_5], %5 {strides = array<i32>} : memref<8x128xf32, #tpu.memory_space<vmem>>, vector<8x128xf32>,
    return
  }
  func.func @transform_0(%arg0: i32, %arg1: i32) -> (i32, i32) {
    %c0_i32 = arith.constant 0 : i32
    %c0_i32_0 = arith.constant 0 : i32
    return %arg0, %c0_i32 : i32, i32
  }
  func.func @transform_1(%arg0: i32, %arg1: i32) -> (i32, i32) {
    %c0_i32 = arith.constant 0 : i32
    %c0_i32_0 = arith.constant 0 : i32
    return %c0_i32, %arg1 : i32, i32
  }
  func.func @transform_2(%arg0: i32, %arg1: i32) -> (i32, i32) {
    %c0_i32 = arith.constant 0 : i32
    return %arg0, %arg1 : i32, i32
  }
}

</mosaic_0001>

<llo_original>
// kernel: tpu_custom_call.1
$region0: #{tpu_custom_call.1}
  #allocation0 [shape = 'u32[]', space=smem, size = 0x4, offset = 0x4, fixed_abs, tag = 'smem constant byte address 0x4 - core index']
  #allocation1 [shape = 'u32[144,128]{1,0:T(1,128)}', space=vmem, size = 0x12000, scoped, tag = 'internal scratch']
  %s0 = inlined_call_operand.hbm [shape: f32[4,4], index: 0, kind: input, shape index: {}]
  %s1 = inlined_call_operand.hbm [shape: f32[5,128], index: 1, kind: input, shape index: {}]
  %s2 = inlined_call_operand.hbm [shape: f32[4,128], index: 2, kind: output, shape index: {}]
  %s3 = sld [smem:[#allocation0]]
  $region26: #{tpu_custom_call.1} parent=0
    _
  %s5 = ssub.s32 1, %s3
  %s6 = scalar_select 0, %s5, %s3
  $region1: #{tpu_custom_call.1} parent=0
    #allocation2 [shape = 'u8[4096]{0}', space=vmem, size = 0x1000, scoped, tag = 'input window, operand 0, single buffered']
    #allocation3 [shape = 's32[1]{0}', space=sflag, size = 0x4, scoped, tag = 'scoped memory for tpu_custom_call.1']
    #allocation4 [shape = 's32[1]{0}', space=sflag, size = 0x4, scoped, tag = 'scoped memory for tpu_custom_call.1']
    #allocation5 [shape = 'u8[4096]{0}', space=vmem, size = 0x1000, scoped, tag = 'input window, operand 1, single buffered']
    #allocation6 [shape = 's32[1]{0}', space=sflag, size = 0x4, scoped, tag = 'scoped memory for tpu_custom_call.1']
    #allocation7 [shape = 'u8[4096]{0}', space=vmem, size = 0x1000, scoped, tag = 'output window, operand 0, single buffered']
    %7 = vsyncpa [#allocation3], 0
    %8 = vsyncpa [#allocation6], 0
    %9 = vsyncpa [#allocation4], 0
    // Predicated region
    $region2: #{tpu_custom_call.1} parent=1 // pred_check
      _
    $region3: #{tpu_custom_call.1} parent=1 // pred_check_branch
      %11 = sbr.rel (0) target = $region5
    $region4: #{tpu_custom_call.1} parent=1 // pred_region
      %s13 = ssub.s32 128, 64
      %14 = vsyncadd [#allocation3], %s13
      %s15 = sshll.u32 [#allocation2], 4
      %s16 = int_to_ptr.vmem [resolvable:$true] %s15
      %21 = dma.hbm_to_vmem [thread:$0]  %s0, 64, %s16, [#allocation3], 64, 64, 4
    $region5: #{tpu_custom_call.1} parent=1 // pred_fallthru
      _
    // Predicated region
    $region6: #{tpu_custom_call.1} parent=1 // pred_check
      _
    $region7: #{tpu_custom_call.1} parent=1 // pred_check_branch
      %23 = sbr.rel (0) target = $region9
    $region8: #{tpu_custom_call.1} parent=1 // pred_region
      %s25 = ssub.s32 128, 128
      %26 = vsyncadd [#allocation6], %s25
      %s28 = sshll.u32 [#allocation5], 4
      %s29 = int_to_ptr.vmem [resolvable:$true] %s28
      %31 = dma.hbm_to_vmem [thread:$0]  %s1, 128, %s29, [#allocation6]
    $region9: #{tpu_custom_call.1} parent=1 // pred_fallthru
      _
    // Predicated region
    $region10: #{tpu_custom_call.1} parent=1 // pred_check
      _
    $region11: #{tpu_custom_call.1} parent=1 // pred_check_branch
      %33 = sbr.rel (0) target = $region13
    $region12: #{tpu_custom_call.1} parent=1 // pred_region
      %34 = dma.done [#allocation3], 128
    $region13: #{tpu_custom_call.1} parent=1 // pred_fallthru
      _
    // Predicated region
    $region14: #{tpu_custom_call.1} parent=1 // pred_check
      _
    $region15: #{tpu_custom_call.1} parent=1 // pred_check_branch
      %36 = sbr.rel (0) target = $region17
    $region16: #{tpu_custom_call.1} parent=1 // pred_region
      %37 = dma.done [#allocation6], 128
    $region17: #{tpu_custom_call.1} parent=1 // pred_fallthru
      _
    %v38 = vld [vmem:[#allocation2] sm:$0xff]
    %v39 = vld [vmem:[#allocation5] sm:$0xf]
    %v40 = vld [vmem:[#allocation5 + $0x4] sm:$0x1]
    %v41 = vlaneseq
    %v42 = vshrl.u32 %v41, 7
    %v43 = vsub.s32 0, %v42
    %v44 = vrot.slane %v40, %v43
    %vm45 = vcmask 31744
    %v47 = vsel %vm45, %v38, 0
    %vm49 = vcmask 1043456
    %v51 = vsel %vm49, %v39, 0
    %53 = vmatprep.subr.mxu0 0.0
    %v54 = vand.u32 %v51, 4294901760
    %55 = vmatpush1.msra.mxu0 %v54
    %56 = vmatprep.subr.mxu0 0.0
    %57 = vmatpush1.msra.mxu0 0.0
    %58 = vmatprep.subr.mxu0 0.0
    %59 = vmatpush1.msra.mxu0 0.0
    %60 = vmatprep.subr.mxu0 0.0
    %61 = vmatpush1.msra.mxu0 0.0
    %62 = vmatprep.subr.mxu0 0.0
    %63 = vmatpush1.msra.mxu0 0.0
    %64 = vmatprep.subr.mxu0 0.0
    %65 = vmatpush1.msra.mxu0 0.0
    %66 = vmatprep.subr.mxu0 0.0
    %67 = vmatpush1.msra.mxu0 0.0
    %68 = vmatprep.subr.mxu0 0.0
    %69 = vmatpush1.msra.mxu0 0.0
    %70 = vmatprep.subr.mxu0 0.0
    %71 = vmatpush1.msra.mxu0 0.0
    %72 = vmatprep.subr.mxu0 0.0
    %73 = vmatpush1.msra.mxu0 0.0
    %74 = vmatprep.subr.mxu0 0.0
    %75 = vmatpush1.msra.mxu0 0.0
    %76 = vmatprep.subr.mxu0 0.0
    %77 = vmatpush1.msra.mxu0 0.0
    %78 = vmatprep.subr.mxu0 0.0
    %79 = vmatpush1.msra.mxu0 0.0
    %80 = vmatprep.subr.mxu0 0.0
    %81 = vmatpush1.msra.mxu0 0.0
    %82 = vmatprep.subr.mxu0 0.0
    %83 = vmatpush1.msra.mxu0 0.0
    %84 = vmatprep.subr.mxu0 0.0
    %85 = vmatpush1.msra.mxu0 0.0
    %86 = vmatprep.subr.mxu0 0.0
    %87 = vmatpush1.msra.mxu0 0.0
    %88 = vmatprep.subr.mxu0 0.0
    %89 = vmatpush1.msra.mxu0 0.0
    %90 = vmatprep.subr.mxu0 0.0
    %91 = vmatpush1.msra.mxu0 0.0
    %92 = vmatprep.subr.mxu0 0.0
    %93 = vmatpush1.msra.mxu0 0.0
    %94 = vmatprep.subr.mxu0 0.0
    %95 = vmatpush1.msra.mxu0 0.0
    %96 = vmatprep.subr.mxu0 0.0
    %97 = vmatpush1.msra.mxu0 0.0
    %98 = vmatprep.subr.mxu0 0.0
    %99 = vmatpush1.msra.mxu0 0.0
    %100 = vmatprep.subr.mxu0 0.0
    %101 = vmatpush1.msra.mxu0 0.0
    %102 = vmatprep.subr.mxu0 0.0
    %103 = vmatpush1.msra.mxu0 0.0
    %104 = vmatprep.subr.mxu0 0.0
    %105 = vmatpush1.msra.mxu0 0.0
    %106 = vmatprep.subr.mxu0 0.0
    %107 = vmatpush1.msra.mxu0 0.0
    %108 = vmatprep.subr.mxu0 0.0
    %109 = vmatpush1.msra.mxu0 0.0
    %110 = vmatprep.subr.mxu0 0.0
    %111 = vmatpush1.msra.mxu0 0.0
    %112 = vmatprep.subr.mxu0 0.0
    %113 = vmatpush1.msra.mxu0 0.0
    %114 = vmatprep.subr.mxu0 0.0
    %115 = vmatpush1.msra.mxu0 0.0
    %116 = vmatprep.subr.mxu0 0.0
    %117 = vmatpush1.msra.mxu0 0.0
    %118 = vmatprep.mubr.f32.mxu0 0.0
    %v119 = vand.u32 %v47, 4294901760
    %v120 = vsub.f32 %v47, %v119
    %v121 = vand.u32 %v120, 4294901760
    %v122 = vsub.f32 %v120, %v121
    %v123 = vand.u32 %v122, 4294901760
    %124 = vmatmul.mubr.f32.gmra.mrb[0].mxu0 %v123
    %v125 = vpop.f32.mrb[0].mxu0
    %v126 = vadd.f32 %v44, %v125
    %v127 = vpop.f32.mrb[0].mxu0
    %128 = vdwg.mxu0
    %129 = vmatprep.subr.mxu0 0.0
    %v130 = vand.u32 %v51, 4294901760
    %v131 = vsub.f32 %v51, %v130
    %v132 = vand.u32 %v131, 4294901760
    %v133 = vsub.f32 %v131, %v132
    %v134 = vand.u32 %v133, 4294901760
    %135 = vmatpush1.msra.mxu0 %v134
    %136 = vmatprep.subr.mxu0 0.0
    %137 = vmatpush1.msra.mxu0 0.0
    %138 = vmatprep.subr.mxu0 0.0
    %139 = vmatpush1.msra.mxu0 0.0
    %140 = vmatprep.subr.mxu0 0.0
    %141 = vmatpush1.msra.mxu0 0.0
    %142 = vmatprep.subr.mxu0 0.0
    %143 = vmatpush1.msra.mxu0 0.0
    %144 = vmatprep.subr.mxu0 0.0
    %145 = vmatpush1.msra.mxu0 0.0
    %146 = vmatprep.subr.mxu0 0.0
    %147 = vmatpush1.msra.mxu0 0.0
    %148 = vmatprep.subr.mxu0 0.0
    %149 = vmatpush1.msra.mxu0 0.0
    %150 = vmatprep.subr.mxu0 0.0
    %151 = vmatpush1.msra.mxu0 0.0
    %152 = vmatprep.subr.mxu0 0.0
    %153 = vmatpush1.msra.mxu0 0.0
    %154 = vmatprep.subr.mxu0 0.0
    %155 = vmatpush1.msra.mxu0 0.0
    %156 = vmatprep.subr.mxu0 0.0
    %157 = vmatpush1.msra.mxu0 0.0
    %158 = vmatprep.subr.mxu0 0.0
    %159 = vmatpush1.msra.mxu0 0.0
    %160 = vmatprep.subr.mxu0 0.0
    %161 = vmatpush1.msra.mxu0 0.0
    %162 = vmatprep.subr.mxu0 0.0
    %163 = vmatpush1.msra.mxu0 0.0
    %164 = vmatprep.subr.mxu0 0.0
    %165 = vmatpush1.msra.mxu0 0.0
    %166 = vmatprep.subr.mxu0 0.0
    %167 = vmatpush1.msra.mxu0 0.0
    %168 = vmatprep.subr.mxu0 0.0
    %169 = vmatpush1.msra.mxu0 0.0
    %170 = vmatprep.subr.mxu0 0.0
    %171 = vmatpush1.msra.mxu0 0.0
    %172 = vmatprep.subr.mxu0 0.0
    %173 = vmatpush1.msra.mxu0 0.0
    %174 = vmatprep.subr.mxu0 0.0
    %175 = vmatpush1.msra.mxu0 0.0
    %176 = vmatprep.subr.mxu0 0.0
    %177 = vmatpush1.msra.mxu0 0.0
    %178 = vmatprep.subr.mxu0 0.0
    %179 = vmatpush1.msra.mxu0 0.0
    %180 = vmatprep.subr.mxu0 0.0
    %181 = vmatpush1.msra.mxu0 0.0
    %182 = vmatprep.subr.mxu0 0.0
    %183 = vmatpush1.msra.mxu0 0.0
    %184 = vmatprep.subr.mxu0 0.0
    %185 = vmatpush1.msra.mxu0 0.0
    %186 = vmatprep.subr.mxu0 0.0
    %187 = vmatpush1.msra.mxu0 0.0
    %188 = vmatprep.subr.mxu0 0.0
    %189 = vmatpush1.msra.mxu0 0.0
    %190 = vmatprep.subr.mxu0 0.0
    %191 = vmatpush1.msra.mxu0 0.0
    %192 = vmatprep.subr.mxu0 0.0
    %193 = vmatpush1.msra.mxu0 0.0
    %194 = vmatprep.subr.mxu0 0.0
    %195 = vmatpush1.msra.mxu0 0.0
    %196 = vmatprep.subr.mxu0 0.0
    %197 = vmatpush1.msra.mxu0 0.0
    %198 = vmatprep.mubr.f32.mxu0 0.0
    %v199 = vand.u32 %v47, 4294901760
    %200 = vmatmul.mubr.f32.gmra.mrb[0].mxu0 %v199
    %v201 = vpop.f32.mrb[0].mxu0
    %v202 = vadd.f32 %v126, %v201
    %v203 = vpop.f32.mrb[0].mxu0
    %204 = vdwg.mxu0
    %205 = vmatprep.subr.mxu0 0.0
    %v206 = vand.u32 %v51, 4294901760
    %v207 = vsub.f32 %v51, %v206
    %208 = vmatpush1.msra.mxu0 %v207
    %209 = vmatprep.subr.mxu0 0.0
    %210 = vmatpush1.msra.mxu0 0.0
    %211 = vmatprep.subr.mxu0 0.0
    %212 = vmatpush1.msra.mxu0 0.0
    %213 = vmatprep.subr.mxu0 0.0
    %214 = vmatpush1.msra.mxu0 0.0
    %215 = vmatprep.subr.mxu0 0.0
    %216 = vmatpush1.msra.mxu0 0.0
    %217 = vmatprep.subr.mxu0 0.0
    %218 = vmatpush1.msra.mxu0 0.0
    %219 = vmatprep.subr.mxu0 0.0
    %220 = vmatpush1.msra.mxu0 0.0
    %221 = vmatprep.subr.mxu0 0.0
    %222 = vmatpush1.msra.mxu0 0.0
    %223 = vmatprep.subr.mxu0 0.0
    %224 = vmatpush1.msra.mxu0 0.0
    %225 = vmatprep.subr.mxu0 0.0
    %226 = vmatpush1.msra.mxu0 0.0
    %227 = vmatprep.subr.mxu0 0.0
    %228 = vmatpush1.msra.mxu0 0.0
    %229 = vmatprep.subr.mxu0 0.0
    %230 = vmatpush1.msra.mxu0 0.0
    %231 = vmatprep.subr.mxu0 0.0
    %232 = vmatpush1.msra.mxu0 0.0
    %233 = vmatprep.subr.mxu0 0.0
    %234 = vmatpush1.msra.mxu0 0.0
    %235 = vmatprep.subr.mxu0 0.0
    %236 = vmatpush1.msra.mxu0 0.0
    %237 = vmatprep.subr.mxu0 0.0
    %238 = vmatpush1.msra.mxu0 0.0
    %239 = vmatprep.subr.mxu0 0.0
    %240 = vmatpush1.msra.mxu0 0.0
    %241 = vmatprep.subr.mxu0 0.0
    %242 = vmatpush1.msra.mxu0 0.0
    %243 = vmatprep.subr.mxu0 0.0
    %244 = vmatpush1.msra.mxu0 0.0
    %245 = vmatprep.subr.mxu0 0.0
    %246 = vmatpush1.msra.mxu0 0.0
    %247 = vmatprep.subr.mxu0 0.0
    %248 = vmatpush1.msra.mxu0 0.0
    %249 = vmatprep.subr.mxu0 0.0
    %250 = vmatpush1.msra.mxu0 0.0
    %251 = vmatprep.subr.mxu0 0.0
    %252 = vmatpush1.msra.mxu0 0.0
    %253 = vmatprep.subr.mxu0 0.0
    %254 = vmatpush1.msra.mxu0 0.0
    %255 = vmatprep.subr.mxu0 0.0
    %256 = vmatpush1.msra.mxu0 0.0
    %257 = vmatprep.subr.mxu0 0.0
    %258 = vmatpush1.msra.mxu0 0.0
    %259 = vmatprep.subr.mxu0 0.0
    %260 = vmatpush1.msra.mxu0 0.0
    %261 = vmatprep.subr.mxu0 0.0
    %262 = vmatpush1.msra.mxu0 0.0
    %263 = vmatprep.subr.mxu0 0.0
    %264 = vmatpush1.msra.mxu0 0.0
    %265 = vmatprep.subr.mxu0 0.0
    %266 = vmatpush1.msra.mxu0 0.0
    %267 = vmatprep.subr.mxu0 0.0
    %268 = vmatpush1.msra.mxu0 0.0
    %269 = vmatprep.subr.mxu0 0.0
    %270 = vmatpush1.msra.mxu0 0.0
    %271 = vmatprep.mubr.f32.mxu0 0.0
    %v272 = vand.u32 %v47, 4294901760
    %v273 = vsub.f32 %v47, %v272
    %274 = vmatmul.mubr.f32.gmra.mrb[0].mxu0 %v273
    %v275 = vpop.f32.mrb[0].mxu0
    %v276 = vadd.f32 %v202, %v275
    %v277 = vpop.f32.mrb[0].mxu0
    %278 = vdwg.mxu0
    %279 = vmatprep.subr.mxu0 0.0
    %v280 = vand.u32 %v51, 4294901760
    %281 = vmatpush1.msra.mxu0 %v280
    %282 = vmatprep.subr.mxu0 0.0
    %283 = vmatpush1.msra.mxu0 0.0
    %284 = vmatprep.subr.mxu0 0.0
    %285 = vmatpush1.msra.mxu0 0.0
    %286 = vmatprep.subr.mxu0 0.0
    %287 = vmatpush1.msra.mxu0 0.0
    %288 = vmatprep.subr.mxu0 0.0
    %289 = vmatpush1.msra.mxu0 0.0
    %290 = vmatprep.subr.mxu0 0.0
    %291 = vmatpush1.msra.mxu0 0.0
    %292 = vmatprep.subr.mxu0 0.0
    %293 = vmatpush1.msra.mxu0 0.0
    %294 = vmatprep.subr.mxu0 0.0
    %295 = vmatpush1.msra.mxu0 0.0
    %296 = vmatprep.subr.mxu0 0.0
    %297 = vmatpush1.msra.mxu0 0.0
    %298 = vmatprep.subr.mxu0 0.0
    %299 = vmatpush1.msra.mxu0 0.0
    %300 = vmatprep.subr.mxu0 0.0
    %301 = vmatpush1.msra.mxu0 0.0
    %302 = vmatprep.subr.mxu0 0.0
    %303 = vmatpush1.msra.mxu0 0.0
    %304 = vmatprep.subr.mxu0 0.0
    %305 = vmatpush1.msra.mxu0 0.0
    %306 = vmatprep.subr.mxu0 0.0
    %307 = vmatpush1.msra.mxu0 0.0
    %308 = vmatprep.subr.mxu0 0.0
    %309 = vmatpush1.msra.mxu0 0.0
    %310 = vmatprep.subr.mxu0 0.0
    %311 = vmatpush1.msra.mxu0 0.0
    %312 = vmatprep.subr.mxu0 0.0
    %313 = vmatpush1.msra.mxu0 0.0
    %314 = vmatprep.subr.mxu0 0.0
    %315 = vmatpush1.msra.mxu0 0.0
    %316 = vmatprep.subr.mxu0 0.0
    %317 = vmatpush1.msra.mxu0 0.0
    %318 = vmatprep.subr.mxu0 0.0
    %319 = vmatpush1.msra.mxu0 0.0
    %320 = vmatprep.subr.mxu0 0.0
    %321 = vmatpush1.msra.mxu0 0.0
    %322 = vmatprep.subr.mxu0 0.0
    %323 = vmatpush1.msra.mxu0 0.0
    %324 = vmatprep.subr.mxu0 0.0
    %325 = vmatpush1.msra.mxu0 0.0
    %326 = vmatprep.subr.mxu0 0.0
    %327 = vmatpush1.msra.mxu0 0.0
    %328 = vmatprep.subr.mxu0 0.0
    %329 = vmatpush1.msra.mxu0 0.0
    %330 = vmatprep.subr.mxu0 0.0
    %331 = vmatpush1.msra.mxu0 0.0
    %332 = vmatprep.subr.mxu0 0.0
    %333 = vmatpush1.msra.mxu0 0.0
    %334 = vmatprep.subr.mxu0 0.0
    %335 = vmatpush1.msra.mxu0 0.0
    %336 = vmatprep.subr.mxu0 0.0
    %337 = vmatpush1.msra.mxu0 0.0
    %338 = vmatprep.subr.mxu0 0.0
    %339 = vmatpush1.msra.mxu0 0.0
    %340 = vmatprep.subr.mxu0 0.0
    %341 = vmatpush1.msra.mxu0 0.0
    %342 = vmatprep.subr.mxu0 0.0
    %343 = vmatpush1.msra.mxu0 0.0
    %344 = vmatprep.mubr.f32.mxu0 0.0
    %v345 = vand.u32 %v47, 4294901760
    %v346 = vsub.f32 %v47, %v345
    %v347 = vand.u32 %v346, 4294901760
    %348 = vmatmul.mubr.f32.gmra.mrb[0].mxu0 %v347
    %v349 = vpop.f32.mrb[0].mxu0
    %v350 = vadd.f32 %v276, %v349
    %v351 = vpop.f32.mrb[0].mxu0
    %352 = vdwg.mxu0
    %353 = vmatprep.subr.mxu0 0.0
    %v354 = vand.u32 %v51, 4294901760
    %v355 = vsub.f32 %v51, %v354
    %v356 = vand.u32 %v355, 4294901760
    %357 = vmatpush1.msra.mxu0 %v356
    %358 = vmatprep.subr.mxu0 0.0
    %359 = vmatpush1.msra.mxu0 0.0
    %360 = vmatprep.subr.mxu0 0.0
    %361 = vmatpush1.msra.mxu0 0.0
    %362 = vmatprep.subr.mxu0 0.0
    %363 = vmatpush1.msra.mxu0 0.0
    %364 = vmatprep.subr.mxu0 0.0
    %365 = vmatpush1.msra.mxu0 0.0
    %366 = vmatprep.subr.mxu0 0.0
    %367 = vmatpush1.msra.mxu0 0.0
    %368 = vmatprep.subr.mxu0 0.0
    %369 = vmatpush1.msra.mxu0 0.0
    %370 = vmatprep.subr.mxu0 0.0
    %371 = vmatpush1.msra.mxu0 0.0
    %372 = vmatprep.subr.mxu0 0.0
    %373 = vmatpush1.msra.mxu0 0.0
    %374 = vmatprep.subr.mxu0 0.0
    %375 = vmatpush1.msra.mxu0 0.0
    %376 = vmatprep.subr.mxu0 0.0
    %377 = vmatpush1.msra.mxu0 0.0
    %378 = vmatprep.subr.mxu0 0.0
    %379 = vmatpush1.msra.mxu0 0.0
    %380 = vmatprep.subr.mxu0 0.0
    %381 = vmatpush1.msra.mxu0 0.0
    %382 = vmatprep.subr.mxu0 0.0
    %383 = vmatpush1.msra.mxu0 0.0
    %384 = vmatprep.subr.mxu0 0.0
    %385 = vmatpush1.msra.mxu0 0.0
    %386 = vmatprep.subr.mxu0 0.0
    %387 = vmatpush1.msra.mxu0 0.0
    %388 = vmatprep.subr.mxu0 0.0
    %389 = vmatpush1.msra.mxu0 0.0
    %390 = vmatprep.subr.mxu0 0.0
    %391 = vmatpush1.msra.mxu0 0.0
    %392 = vmatprep.subr.mxu0 0.0
    %393 = vmatpush1.msra.mxu0 0.0
    %394 = vmatprep.subr.mxu0 0.0
    %395 = vmatpush1.msra.mxu0 0.0
    %396 = vmatprep.subr.mxu0 0.0
    %397 = vmatpush1.msra.mxu0 0.0
    %398 = vmatprep.subr.mxu0 0.0
    %399 = vmatpush1.msra.mxu0 0.0
    %400 = vmatprep.subr.mxu0 0.0
    %401 = vmatpush1.msra.mxu0 0.0
    %402 = vmatprep.subr.mxu0 0.0
    %403 = vmatpush1.msra.mxu0 0.0
    %404 = vmatprep.subr.mxu0 0.0
    %405 = vmatpush1.msra.mxu0 0.0
    %406 = vmatprep.subr.mxu0 0.0
    %407 = vmatpush1.msra.mxu0 0.0
    %408 = vmatprep.subr.mxu0 0.0
    %409 = vmatpush1.msra.mxu0 0.0
    %410 = vmatprep.subr.mxu0 0.0
    %411 = vmatpush1.msra.mxu0 0.0
    %412 = vmatprep.subr.mxu0 0.0
    %413 = vmatpush1.msra.mxu0 0.0
    %414 = vmatprep.subr.mxu0 0.0
    %415 = vmatpush1.msra.mxu0 0.0
    %416 = vmatprep.subr.mxu0 0.0
    %417 = vmatpush1.msra.mxu0 0.0
    %418 = vmatprep.subr.mxu0 0.0
    %419 = vmatpush1.msra.mxu0 0.0
    %420 = vmatprep.mubr.f32.mxu0 0.0
    %v421 = vand.u32 %v47, 4294901760
    %422 = vmatmul.mubr.f32.gmra.mrb[0].mxu0 %v421
    %v423 = vpop.f32.mrb[0].mxu0
    %v424 = vadd.f32 %v350, %v423
    %v425 = vpop.f32.mrb[0].mxu0
    %426 = vdwg.mxu0
    %427 = vmatprep.subr.mxu0 0.0
    %v428 = vand.u32 %v51, 4294901760
    %429 = vmatpush1.msra.mxu0 %v428
    %430 = vmatprep.subr.mxu0 0.0
    %431 = vmatpush1.msra.mxu0 0.0
    %432 = vmatprep.subr.mxu0 0.0
    %433 = vmatpush1.msra.mxu0 0.0
    %434 = vmatprep.subr.mxu0 0.0
    %435 = vmatpush1.msra.mxu0 0.0
    %436 = vmatprep.subr.mxu0 0.0
    %437 = vmatpush1.msra.mxu0 0.0
    %438 = vmatprep.subr.mxu0 0.0
    %439 = vmatpush1.msra.mxu0 0.0
    %440 = vmatprep.subr.mxu0 0.0
    %441 = vmatpush1.msra.mxu0 0.0
    %442 = vmatprep.subr.mxu0 0.0
    %443 = vmatpush1.msra.mxu0 0.0
    %444 = vmatprep.subr.mxu0 0.0
    %445 = vmatpush1.msra.mxu0 0.0
    %446 = vmatprep.subr.mxu0 0.0
    %447 = vmatpush1.msra.mxu0 0.0
    %448 = vmatprep.subr.mxu0 0.0
    %449 = vmatpush1.msra.mxu0 0.0
    %450 = vmatprep.subr.mxu0 0.0
    %451 = vmatpush1.msra.mxu0 0.0
    %452 = vmatprep.subr.mxu0 0.0
    %453 = vmatpush1.msra.mxu0 0.0
    %454 = vmatprep.subr.mxu0 0.0
    %455 = vmatpush1.msra.mxu0 0.0
    %456 = vmatprep.subr.mxu0 0.0
    %457 = vmatpush1.msra.mxu0 0.0
    %458 = vmatprep.subr.mxu0 0.0
    %459 = vmatpush1.msra.mxu0 0.0
    %460 = vmatprep.subr.mxu0 0.0
    %461 = vmatpush1.msra.mxu0 0.0
    %462 = vmatprep.subr.mxu0 0.0
    %463 = vmatpush1.msra.mxu0 0.0
    %464 = vmatprep.subr.mxu0 0.0
    %465 = vmatpush1.msra.mxu0 0.0
    %466 = vmatprep.subr.mxu0 0.0
    %467 = vmatpush1.msra.mxu0 0.0
    %468 = vmatprep.subr.mxu0 0.0
    %469 = vmatpush1.msra.mxu0 0.0
    %470 = vmatprep.subr.mxu0 0.0
    %471 = vmatpush1.msra.mxu0 0.0
    %472 = vmatprep.subr.mxu0 0.0
    %473 = vmatpush1.msra.mxu0 0.0
    %474 = vmatprep.subr.mxu0 0.0
    %475 = vmatpush1.msra.mxu0 0.0
    %476 = vmatprep.subr.mxu0 0.0
    %477 = vmatpush1.msra.mxu0 0.0
    %478 = vmatprep.subr.mxu0 0.0
    %479 = vmatpush1.msra.mxu0 0.0
    %480 = vmatprep.subr.mxu0 0.0
    %481 = vmatpush1.msra.mxu0 0.0
    %482 = vmatprep.subr.mxu0 0.0
    %483 = vmatpush1.msra.mxu0 0.0
    %484 = vmatprep.subr.mxu0 0.0
    %485 = vmatpush1.msra.mxu0 0.0
    %486 = vmatprep.subr.mxu0 0.0
    %487 = vmatpush1.msra.mxu0 0.0
    %488 = vmatprep.subr.mxu0 0.0
    %489 = vmatpush1.msra.mxu0 0.0
    %490 = vmatprep.subr.mxu0 0.0
    %491 = vmatpush1.msra.mxu0 0.0
    %492 = vmatprep.mubr.f32.mxu0 0.0
    %v493 = vand.u32 %v47, 4294901760
    %494 = vmatmul.mubr.f32.gmra.mrb[0].mxu0 %v493
    %v495 = vpop.f32.mrb[0].mxu0
    %v496 = vadd.f32 %v424, %v495
    %v497 = vpop.f32.mrb[0].mxu0
    %498 = vdwg.mxu0
    %499 = vst [vmem:[#allocation7] sm:$0xff] %v496
    // Predicated region
    $region18: #{tpu_custom_call.1} parent=1 // pred_check
      _
    $region19: #{tpu_custom_call.1} parent=1 // pred_check_branch
      %501 = sbr.rel (0) target = $region21
    $region20: #{tpu_custom_call.1} parent=1 // pred_region
      %s503 = ssub.s32 128, 64
      %504 = vsyncadd [#allocation4], %s503
      %s505 = sshll.u32 [#allocation7], 4
      %s506 = int_to_ptr.vmem [resolvable:$true] %s505
      %511 = dma.vmem_to_hbm [thread:$0]  %s506, 64, %s2, [#allocation4], 64, 64, 4
    $region21: #{tpu_custom_call.1} parent=1 // pred_fallthru
      _
    // Predicated region
    $region22: #{tpu_custom_call.1} parent=1 // pred_check
      _
    $region23: #{tpu_custom_call.1} parent=1 // pred_check_branch
      %513 = sbr.rel (0) target = $region25
    $region24: #{tpu_custom_call.1} parent=1 // pred_region
      %514 = dma.done [#allocation4], 128
    $region25: #{tpu_custom_call.1} parent=1 // pred_fallthru
      _
    %515 = vsyncpa [#allocation3], 1
    %516 = vsyncpa [#allocation6], 1
    %517 = vsyncpa [#allocation4], 1

</llo_original>
